<compile_context>
chip_gen: v6e
topology: v6e:2x2x1
jax: 0.10.0
libtpu: 0.0.40
codegen_flags: <defaults>
</compile_context>

<pallas_src>
import functools

import jax
import jax.numpy as jnp
from jax.experimental import pallas as pl
from jax.experimental.pallas import tpu as pltpu


def _layernorm_kernel(x_ref, g_ref, b_ref, o_ref, *, eps, hw):
    # x_ref: (block_rows, HW) tile; g_ref / b_ref: (block_rows, 1) f32 columns.
    x = x_ref[...].astype(jnp.float32)

    # One-pass statistics: scale reductions by Python constants, no divides.
    mean = jnp.sum(x, axis=-1, keepdims=True) * (1.0 / hw)
    sumsq = jnp.sum(x * x, axis=-1, keepdims=True)

    # torch.std default is unbiased (divisor hw - 1); eps is added to std.
    inv_div = 1.0 / (hw - 1) if hw > 1 else 1.0
    var = (sumsq - hw * (mean * mean)) * inv_div
    var = jnp.maximum(var, 0.0)          # guard cancellation -> sqrt(neg)
    std = jnp.sqrt(var)

    # Exact per-row reciprocal: (block_rows, 1) column, negligible cost, and
    # keeps the output bit-close to the PyTorch reference.
    inv = 1.0 / (std + eps)

    scale = g_ref[...] * inv             # gamma / (std + eps)
    shift = b_ref[...] - mean * scale    # fused affine; xc never materialized
    o_ref[...] = (x * scale + shift).astype(o_ref.dtype)


def _tpu_budgets():
    """(target input-tile bytes, vmem_limit_bytes), generation-aware."""
    try:
        vmem = pltpu.get_tpu_info().vmem_capacity_bytes
    except Exception:
        vmem = 64 * 1024 * 1024          # assume the smallest (v7x-sized) VMEM
    if vmem >= 128 * 1024 * 1024:        # v5e / v6e
        return 4 << 20, 64 * 1024 * 1024
    return 2 << 20, 32 * 1024 * 1024     # v7x: 64 MiB physical VMEM


def _choose_block_rows(n_rows, hw, itemsize, target_tile_bytes):
    """Row block: sublane-packing aligned, ~target-sized, >=4 grid steps."""
    pack = 8 * max(1, 4 // itemsize)     # 8 (f32) / 16 (bf16) / 32 (i8/fp8)
    rows = (target_tile_bytes // max(1, hw * itemsize)) // pack * pack
    rows = max(pack, rows)
    # Aim for >= 4 grid steps (>= 2 per TensorCore on v7x) when there is
    # enough work: keeps DMA/compute overlap and balances the two cores.
    if n_rows >= 4 * pack:
        rows = min(rows, pl.cdiv(pl.cdiv(n_rows, 4), pack) * pack)
    # Never exceed the (packing-rounded) total row count.
    rows = min(rows, pl.cdiv(n_rows, pack) * pack)
    return rows
    # TODO(synk): for huge H*W (tile > VMEM even at `pack` rows) a lane-blocked
    # two-level reduction would be needed; not required for this module.


def layer_norm(x, weight, bias, eps=1e-5):
    """Matches LayerNorm.forward on NCHW input (unbiased std, eps added to std)."""
    N, C, H, W = x.shape
    R, HW = N * C, H * W

    target_tile_bytes, vmem_limit = _tpu_budgets()
    block_rows = _choose_block_rows(
        R, HW, jnp.dtype(x.dtype).itemsize, target_tile_bytes)
    grid = (pl.cdiv(R, block_rows),)

    # (R, HW) view of the NCHW input: free reshape, reduction axis on lanes,
    # no padding / no extra HBM traffic. Ragged last row block (if any) is
    # handled by Pallas block masking.
    x2 = x.reshape(R, HW)

    # Per-row gamma/beta columns in f32 (row r uses channel r % C). Tiny
    # (R * 4 B) next to the x traffic; kept f32 to avoid double rounding.
    # TODO(synk): an (N, C-block) grid indexing a (C, 1) array directly would
    # remove this small wrapper-side materialization.
    g = jnp.broadcast_to(weight.astype(jnp.float32)[None, :], (N, C)).reshape(R, 1)
    b = jnp.broadcast_to(bias.astype(jnp.float32)[None, :], (N, C)).reshape(R, 1)

    out = pl.pallas_call(
        functools.partial(_layernorm_kernel, eps=eps, hw=HW),
        out_shape=jax.ShapeDtypeStruct((R, HW), x.dtype),
        grid_spec=pltpu.PrefetchScalarGridSpec(
            num_scalar_prefetch=0,
            grid=grid,
            in_specs=[
                pl.BlockSpec((block_rows, HW), lambda i: (i, 0)),
                pl.BlockSpec((block_rows, 1), lambda i: (i, 0)),
                pl.BlockSpec((block_rows, 1), lambda i: (i, 0)),
            ],
            out_specs=pl.BlockSpec((block_rows, HW), lambda i: (i, 0)),
        ),
        compiler_params=pltpu.CompilerParams(
            dimension_semantics=("parallel",),
            vmem_limit_bytes=vmem_limit,
        ),
    )(x2, g, b)

    return out.reshape(N, C, H, W)


def _reference(x, weight, bias, eps=1e-5):
    N, C, H, W = x.shape
    xf = x.reshape(N, C, -1).astype(jnp.float32)
    mean = jnp.mean(xf, axis=-1, keepdims=True)
    std = jnp.sqrt(
        jnp.sum((xf - mean) ** 2, axis=-1, keepdims=True) / (H * W - 1))
    y = ((xf - mean) / (std + eps)).reshape(N, C, H, W)
    return y * weight.reshape(1, C, 1, 1) + bias.reshape(1, C, 1, 1)


if __name__ == "__main__":
    key = jax.random.PRNGKey(0)
    kx, kw, kb = jax.random.split(key, 3)
    N, C, H, W = 2, 4, 16, 16

    x = jax.random.normal(kx, (N, C, H, W), dtype=jnp.float32)
    weight = jax.random.normal(kw, (C,), dtype=jnp.float32)
    bias = jax.random.normal(kb, (C,), dtype=jnp.float32)

    out = layer_norm(x, weight, bias, eps=1e-5)
    out = jax.block_until_ready(out)
    ref = _reference(x, weight, bias, eps=1e-5)

    assert out.shape == (N, C, H, W)
    assert jnp.allclose(out, ref, atol=1e-3, rtol=1e-3), "mismatch vs reference"

    print("KERNEL_OK")
</pallas_src>

<mosaic_0001>
module attributes {stable_mosaic.version = 11 : i64} {
  func.func @_layernorm_kernel(%arg0: i32, %arg1: memref<8x256xf32, #tpu.memory_space<vmem>>, %arg2: memref<8x1xf32, #tpu.memory_space<vmem>>, %arg3: memref<8x1xf32, #tpu.memory_space<vmem>>, %arg4: memref<8x256xf32, #tpu.memory_space<vmem>>) attributes {dimension_semantics = [#tpu.dimension_semantics<parallel>], iteration_bounds = array<i64: 1>, scalar_prefetch = 0 : i64, scratch_operands = 0 : i64, tpu.core_type = #tpu.core_type<tc>, window_params = [{transform_indices = @transform_0, window_bounds = array<i64: 8, 256>}, {transform_indices = @transform_1, window_bounds = array<i64: 8, 1>}, {transform_indices = @transform_2, window_bounds = array<i64: 8, 1>}, {transform_indices = @transform_3, window_bounds = array<i64: 8, 256>}]} {
    %c0 = arith.constant 0 : index
    %c0_0 = arith.constant 0 : index
    %0 = vector.load %arg1[%c0, %c0_0] : memref<8x256xf32, #tpu.memory_space<vmem>>, vector<8x256xf32>
    %cst = arith.constant dense<0.000000e+00> : vector<8xf32>
    %1 = vector.multi_reduction <add>, %0, %cst [1] : vector<8x256xf32> to vector<8xf32>
    %2 = vector.shape_cast %1 : vector<8xf32> to vector<8x1xf32>
    %cst_1 = arith.constant 3.906250e-03 : f32
    %3 = vector.broadcast %cst_1 : f32 to vector<8x1xf32>
    %4 = arith.mulf %2, %3 : vector<8x1xf32>
    %5 = arith.mulf %0, %0 : vector<8x256xf32>
    %cst_2 = arith.constant dense<0.000000e+00> : vector<8xf32>
    %6 = vector.multi_reduction <add>, %5, %cst_2 [1] : vector<8x256xf32> to vector<8xf32>
    %7 = vector.shape_cast %6 : vector<8xf32> to vector<8x1xf32>
    %8 = arith.mulf %4, %4 : vector<8x1xf32>
    %cst_3 = arith.constant 2.560000e+02 : f32
    %9 = vector.broadcast %cst_3 : f32 to vector<8x1xf32>
    %10 = arith.mulf %9, %8 : vector<8x1xf32>
    %11 = arith.subf %7, %10 : vector<8x1xf32>
    %cst_4 = arith.constant 0.00392156886 : f32
    %12 = vector.broadcast %cst_4 : f32 to vector<8x1xf32>
    %13 = arith.mulf %11, %12 : vector<8x1xf32>
    %cst_5 = arith.constant 0.000000e+00 : f32
    %14 = vector.broadcast %cst_5 : f32 to vector<8x1xf32>
    %15 = arith.maximumf %13, %14 : vector<8x1xf32>
    %16 = math.sqrt %15 : vector<8x1xf32>
    %cst_6 = arith.constant 9.99999974E-6 : f32
    %17 = vector.broadcast %cst_6 : f32 to vector<8x1xf32>
    %18 = arith.addf %16, %17 : vector<8x1xf32>
    %cst_7 = arith.constant 1.000000e+00 : f32
    %19 = vector.broadcast %cst_7 : f32 to vector<8x1xf32>
    %20 = arith.divf %19, %18 : vector<8x1xf32>
    %c0_8 = arith.constant 0 : index
    %c0_9 = arith.constant 0 : index
    %21 = vector.load %arg2[%c0_8, %c0_9] : memref<8x1xf32, #tpu.memory_space<vmem>>, vector<8x1xf32>
    %22 = arith.mulf %21, %20 : vector<8x1xf32>
    %c0_10 = arith.constant 0 : index
    %c0_11 = arith.constant 0 : index
    %23 = vector.load %arg3[%c0_10, %c0_11] : memref<8x1xf32, #tpu.memory_space<vmem>>, vector<8x1xf32>
    %24 = arith.mulf %4, %22 : vector<8x1xf32>
    %25 = arith.subf %23, %24 : vector<8x1xf32>
    %26 = vector.broadcast %22 : vector<8x1xf32> to vector<8x256xf32>
    %27 = arith.mulf %0, %26 : vector<8x256xf32>
    %28 = vector.broadcast %25 : vector<8x1xf32> to vector<8x256xf32>
    %29 = arith.addf %27, %28 : vector<8x256xf32>
    %c0_12 = arith.constant 0 : index
    %c0_13 = arith.constant 0 : index
    %30 = vector.load %arg4[%c0_12, %c0_13] : memref<8x256xf32, #tpu.memory_space<vmem>>, vector<8x256xf32>
    tpu.vector_store %arg4[%c0_12, %c0_13], %29 {strides = array<i32>} : memref<8x256xf32, #tpu.memory_space<vmem>>, vector<8x256xf32>,
    return
  }
  func.func @transform_0(%arg0: i32) -> (i32, i32) {
    %c0_i32 = arith.constant 0 : i32
    %c0_i32_0 = arith.constant 0 : i32
    return %arg0, %c0_i32 : i32, i32
  }
  func.func @transform_1(%arg0: i32) -> (i32, i32) {
    %c0_i32 = arith.constant 0 : i32
    %c0_i32_0 = arith.constant 0 : i32
    return %arg0, %c0_i32 : i32, i32
  }
  func.func @transform_2(%arg0: i32) -> (i32, i32) {
    %c0_i32 = arith.constant 0 : i32
    %c0_i32_0 = arith.constant 0 : i32
    return %arg0, %c0_i32 : i32, i32
  }
  func.func @transform_3(%arg0: i32) -> (i32, i32) {
    %c0_i32 = arith.constant 0 : i32
    %c0_i32_0 = arith.constant 0 : i32
    return %arg0, %c0_i32 : i32, i32
  }
}

</mosaic_0001>

<llo_original>
// kernel: tpu_custom_call.1
$region0: #{tpu_custom_call.1}
  #allocation0 [shape = 'u32[]', space=smem, size = 0x4, offset = 0x4, fixed_abs, tag = 'smem constant byte address 0x4 - core index']
  #allocation1 [shape = 'u32[144,128]{1,0:T(1,128)}', space=vmem, size = 0x12000, scoped, tag = 'internal scratch']
  %s0 = inlined_call_operand.vmem [shape: f32[8,256], index: 0, kind: input, shape index: {}]
  %s1 = inlined_call_operand.vmem [shape: f32[8,1], index: 1, kind: input, shape index: {}]
  %s2 = inlined_call_operand.vmem [shape: f32[8,1], index: 2, kind: input, shape index: {}]
  %s3 = inlined_call_operand.hbm [shape: f32[8,256], index: 3, kind: output, shape index: {}]
  %s4 = sld [smem:[#allocation0]]
  $region22: #{tpu_custom_call.1} parent=0
    _
  %s6 = ssub.s32 1, %s4
  %s7 = scalar_select 0, %s6, %s4
  $region1: #{tpu_custom_call.1} parent=0
    #allocation2 [shape = 'u8[8192]{0}', space=vmem, size = 0x2000, scoped, tag = 'output window, operand 0, single buffered']
    #allocation3 [shape = 's32[1]{0}', space=sflag, size = 0x4, scoped, tag = 'scoped memory for tpu_custom_call.1']
    %8 = vsyncpa [#allocation3], 0
    // Predicated region
    $region2: #{tpu_custom_call.1} parent=1 // pred_check
      _
    $region3: #{tpu_custom_call.1} parent=1 // pred_check_branch
      %10 = sbr.rel (0) target = $region5
    $region4: #{tpu_custom_call.1} parent=1 // pred_region
      _
    $region5: #{tpu_custom_call.1} parent=1 // pred_fallthru
      _
    // Predicated region
    $region6: #{tpu_custom_call.1} parent=1 // pred_check
      _
    $region7: #{tpu_custom_call.1} parent=1 // pred_check_branch
      %12 = sbr.rel (0) target = $region9
    $region8: #{tpu_custom_call.1} parent=1 // pred_region
      _
    $region9: #{tpu_custom_call.1} parent=1 // pred_fallthru
      _
    // Predicated region
    $region10: #{tpu_custom_call.1} parent=1 // pred_check
      _
    $region11: #{tpu_custom_call.1} parent=1 // pred_check_branch
      %14 = sbr.rel (0) target = $region13
    $region12: #{tpu_custom_call.1} parent=1 // pred_region
      _
    $region13: #{tpu_custom_call.1} parent=1 // pred_fallthru
      _
    %v15 = vld [vmem:[%s0] sm:$0xff]
    %v16 = vld [vmem:[%s0 + $0x8] sm:$0xff]
    %v17 = vadd.f32 %v15, %v16
    %18 = vadd.xlane.f32.xlu0 %v17
    %v19 = vpop.xlane.xlu0 %18
    %v20 = vmul.f32 %v19, 0.00390625
    %v21 = vmul.f32 %v15, %v15
    %v22 = vmul.f32 %v16, %v16
    %v23 = vadd.f32 %v21, %v22
    %24 = vadd.xlane.f32.xlu0 %v23
    %v25 = vpop.xlane.xlu0 %24
    %v26 = vmul.f32 %v20, %v20
    %v27 = vmul.f32 %v26, 256.0
    %v28 = vsub.f32 %v25, %v27
    %v29 = vmul.f32 %v28, 0.003921569
    %v30 = vmax.f32 %v29, 0.0
    %v31 = vrsqrt.pop %v30
    %v32 = vmul.f32 %v30, %v31
    %vm33 = vcmp.eq.f32.partialorder %v30, inf
    %v34 = vsel %vm33, %v30, %v32
    %vm35 = vcmp.eq.f32.partialorder %v30, 0.0
    %v36 = vand.u32 %v30, 2147483648
    %v37 = vsel %vm35, %v36, %v34
    %v38 = vadd.f32 %v37, 1e-05
    %v39 = vrcp.pop %v38
    %v40 = vmul.f32 1.0, %v39
    %v41 = vld [vmem:[%s1] sm:$0xff]
    %v42 = vmul.f32 %v41, %v40
    %v43 = vld [vmem:[%s2] sm:$0xff]
    %v44 = vmul.f32 %v20, %v42
    %v45 = vsub.f32 %v43, %v44
    %47 = vset.pattern.permute.xlu0 0
    %48 = vperm.xlu0 %47, %v42
    %v49 = vpop.permute.xlu0 %48
    %v51 = vmul.f32 %v15, %v49
    %v52 = vmul.f32 %v16, %v49
    %54 = vset.pattern.permute.xlu0 0
    %55 = vperm.xlu0 %54, %v45
    %v56 = vpop.permute.xlu0 %55
    %v58 = vadd.f32 %v51, %v56
    %v59 = vadd.f32 %v52, %v56
    %60 = vst [vmem:[#allocation2] sm:$0xff] %v58
    %61 = vst [vmem:[#allocation2 + $0x8] sm:$0xff] %v59
    // Predicated region
    $region14: #{tpu_custom_call.1} parent=1 // pred_check
      _
    $region15: #{tpu_custom_call.1} parent=1 // pred_check_branch
      %63 = sbr.rel (0) target = $region17
    $region16: #{tpu_custom_call.1} parent=1 // pred_region
      %s65 = ssub.s32 256, 256
      %66 = vsyncadd [#allocation3], %s65
      %s68 = sshll.u32 [#allocation2], 4
      %s69 = int_to_ptr.vmem [resolvable:$true] %s68
      %71 = dma.vmem_to_hbm [thread:$0]  %s69, 256, %s3, [#allocation3]
    $region17: #{tpu_custom_call.1} parent=1 // pred_fallthru
      _
    // Predicated region
    $region18: #{tpu_custom_call.1} parent=1 // pred_check
      _
    $region19: #{tpu_custom_call.1} parent=1 // pred_check_branch
      %73 = sbr.rel (0) target = $region21
    $region20: #{tpu_custom_call.1} parent=1 // pred_region
      %74 = dma.done [#allocation3], 256
    $region21: #{tpu_custom_call.1} parent=1 // pred_fallthru
      _
    %75 = vsyncpa [#allocation3], 1

</llo_original>
